<compile_context>
chip_gen: v7x
topology: tpu7x:2x2x1
jax: 0.10.0
libtpu: 0.0.40
codegen_flags: <defaults>
</compile_context>

<pallas_src>
import functools

import jax
import jax.numpy as jnp
from jax.experimental import pallas as pl
from jax.experimental.pallas import tpu as pltpu


def _self_attention_kernel(x_ref, w1_ref, b1_ref, w2_ref, b2_ref, o_ref, *,
                           batches_per_tile, seq, seq_pad):
    # x_ref:  (bt*S_pad, 2H)   matmul dtype (bf16 by default)
    # w1_ref: (2H, da)         matmul dtype
    # b1_ref: (1, da)          f32
    # w2_ref: (da, R_PAD)      matmul dtype
    # b2_ref: (1, R_PAD)       f32
    # o_ref:  (bt*S_pad, R_PAD) f32
    x = x_ref[...]

    # Linear(2H -> da) on the MXU (f32 accumulate); bias + tanh on VPU/EUP in
    # f32 (v5e has no bf16 VPU/EUP).  tanh width stays the true da.
    h = jnp.tanh(
        jnp.dot(x, w1_ref[...], preferred_element_type=jnp.float32)
        + b1_ref[...]
    )                                                       # (rows, da) f32

    # Linear(da -> R_PAD): lane-dense MXU N and lane-dense (unmasked) stores.
    s = (
        jnp.dot(h.astype(w2_ref.dtype), w2_ref[...],
                preferred_element_type=jnp.float32)
        + b2_ref[...]
    )                                                       # (rows, R_PAD) f32

    rpad = s.shape[-1]
    # Vectorized per-batch softmax over the sequence axis: view the tile as
    # (bt, S_pad, R_PAD) — a pure sublane regroup since S_pad % 8 == 0, so no
    # (8,128) vreg boundary is crossed — and reduce over axis=1.
    s3 = s.reshape(batches_per_tile, seq_pad, rpad)
    if seq_pad != seq:
        # Mask padded sequence rows so they take no probability mass.
        seq_ids = jax.lax.broadcasted_iota(jnp.int32, (seq_pad, rpad), 0)
        s3 = jnp.where((seq_ids < seq)[None, :, :], s3, -jnp.inf)

    m = jnp.max(s3, axis=1, keepdims=True)                  # (bt, 1, R_PAD)
    e = jnp.exp(s3 - m)                                     # EUP
    denom = jnp.sum(e, axis=1, keepdims=True)               # XLU/sublane reduce
    p = e * pl.reciprocal(denom, approx=True)               # EUP rcp + VPU mul
    o_ref[...] = p.reshape(batches_per_tile * seq_pad, rpad).astype(o_ref.dtype)


def self_attention(x, w1, b1, w2, b2, *, matmul_dtype=jnp.bfloat16,
                   target_tile_rows=1024):
    """x: (B, S, 2H); w1: (2H, da); b1: (da,); w2: (da, r); b2: (r,).

    Returns softmax(tanh(x @ w1 + b1) @ w2 + b2, axis=1) as (B, S, r) f32.
    """
    B, S, D = x.shape
    da = w1.shape[1]
    r = w2.shape[1]
    R_PAD = max(128, ((r + 127) // 128) * 128)     # lane-dense output columns
    S_pad = ((S + 7) // 8) * 8                     # sublane-aligned sequence

    # Whole-batch row tiles: bt batches per grid step, rows = bt*S_pad.
    # Bounded (~target_tile_rows) so double-buffered tiles stay far under
    # v7x's 64 MiB VMEM while still ~85% of HBM roofline; bt divides B so
    # there are no partial tiles.
    bt = max(1, min(B, target_tile_rows // S_pad))
    while B % bt:
        bt -= 1
    n_tiles = B // bt
    rows = bt * S_pad
    # TODO(synk): for very long S (one (S_pad, R_PAD) slab too big for VMEM)
    # add an "arbitrary" S grid axis with an online-softmax accumulator.

    # Wrapper-side layout plumbing (pure XLA, outside the kernel).
    if S_pad != S:
        x = jnp.pad(x, ((0, 0), (0, S_pad - S), (0, 0)))
    x2d = x.reshape(B * S_pad, D).astype(matmul_dtype)       # bf16 halves DMA
    w1_c = w1.astype(matmul_dtype)
    b1_2d = b1.reshape(1, da).astype(jnp.float32)
    w2_pad = jnp.zeros((da, R_PAD), matmul_dtype).at[:, :r].set(
        w2.astype(matmul_dtype))
    b2_pad = jnp.zeros((1, R_PAD), jnp.float32).at[0, :r].set(
        b2.astype(jnp.float32))
    # TODO(synk): at large B*S the (rows, R_PAD) output writes ~32x more bytes
    # than the real r columns; switch to a transposed (B, r, S) lane-dense
    # layout (or masked stores) once the kernel becomes write-bound.

    itemsize = jnp.dtype(matmul_dtype).itemsize
    cost = pl.CostEstimate(
        flops=2 * B * S * (D * da + da * r),                 # real columns
        transcendentals=B * S * (da + r),                    # tanh + exp
        bytes_accessed=(B * S_pad * D * itemsize             # x in
                        + (D * da + da * R_PAD) * itemsize   # weights
                        + (da + R_PAD) * 4                   # biases
                        + B * S_pad * R_PAD * 4),            # out
    )

    # Raise the scoped-VMEM limit only when the double-buffered tiles need it.
    vmem_est = (2 * rows * (D * itemsize + R_PAD * 4)
                + (D * da + da * R_PAD) * itemsize + (da + R_PAD) * 4)
    vmem_limit = int(1.5 * vmem_est) if vmem_est > (24 << 20) else None

    kernel = functools.partial(_self_attention_kernel, batches_per_tile=bt,
                               seq=S, seq_pad=S_pad)

    out = pl.pallas_call(
        kernel,
        out_shape=jax.ShapeDtypeStruct((B * S_pad, R_PAD), jnp.float32),
        grid_spec=pltpu.PrefetchScalarGridSpec(
            num_scalar_prefetch=0,
            grid=(n_tiles,),
            in_specs=[
                pl.BlockSpec((rows, D), lambda i: (i, 0)),
                pl.BlockSpec((D, da), lambda i: (0, 0)),       # resident
                pl.BlockSpec((1, da), lambda i: (0, 0)),       # resident
                pl.BlockSpec((da, R_PAD), lambda i: (0, 0)),   # resident
                pl.BlockSpec((1, R_PAD), lambda i: (0, 0)),    # resident
            ],
            out_specs=pl.BlockSpec((rows, R_PAD), lambda i: (i, 0)),
        ),
        compiler_params=pltpu.CompilerParams(
            dimension_semantics=("parallel",),   # megacore-shardable on v7x
            vmem_limit_bytes=vmem_limit,
        ),
        cost_estimate=cost,
    )(x2d, w1_c, b1_2d, w2_pad, b2_pad)

    # Drop sequence/column padding; padded columns/rows softmaxed separately
    # (or masked), so the real entries are unaffected.
    return out.reshape(B, S_pad, R_PAD)[:, :S, :r]


def self_attention_ref(x, w1, b1, w2, b2):
    s = jnp.tanh(x @ w1 + b1) @ w2 + b2
    return jax.nn.softmax(s, axis=1)


if __name__ == "__main__":
    # Small shapes consistent with the module: lstm_dim=16 -> feature dim 32,
    # da=16, r=4, batch=2, seq=8.
    lstm_dim, da, r = 16, 16, 4
    B, S = 2, 8
    D = 2 * lstm_dim

    key = jax.random.PRNGKey(0)
    kx, k1, k2, k3, k4 = jax.random.split(key, 5)

    # Deterministic parameter init (PyTorch-Linear-style uniform bounds).
    bound1 = 1.0 / (D ** 0.5)
    bound2 = 1.0 / (da ** 0.5)
    w1 = jax.random.uniform(k1, (D, da), jnp.float32, -bound1, bound1)
    b1 = jax.random.uniform(k2, (da,), jnp.float32, -bound1, bound1)
    w2 = jax.random.uniform(k3, (da, r), jnp.float32, -bound2, bound2)
    b2 = jax.random.uniform(k4, (r,), jnp.float32, -bound2, bound2)

    x = jax.random.normal(kx, (B, S, D), jnp.float32)

    out = self_attention(x, w1, b1, w2, b2)
    out = jax.block_until_ready(out)

    ref = self_attention_ref(x, w1, b1, w2, b2)
    assert out.shape == (B, S, r)
    # Tolerance accounts for bf16 matmul operands (f32 accumulate) and the
    # approximate EUP reciprocal in the softmax normalization (~1e-3 absolute
    # on probabilities).  Pass matmul_dtype=jnp.float32 for exact f32.
    assert jnp.allclose(out, ref, atol=1e-2, rtol=1e-2), \
        float(jnp.max(jnp.abs(out - ref)))

    print("KERNEL_OK")
</pallas_src>

<mosaic_0001>
module attributes {stable_mosaic.version = 11 : i64} {
  func.func @_self_attention_kernel(%arg0: i32, %arg1: memref<16x32xbf16, #tpu.memory_space<vmem>>, %arg2: memref<32x16xbf16, #tpu.memory_space<vmem>>, %arg3: memref<1x16xf32, #tpu.memory_space<vmem>>, %arg4: memref<16x128xbf16, #tpu.memory_space<vmem>>, %arg5: memref<1x128xf32, #tpu.memory_space<vmem>>, %arg6: memref<16x128xf32, #tpu.memory_space<vmem>>) attributes {dimension_semantics = [#tpu.dimension_semantics<parallel>], iteration_bounds = array<i64: 1>, scalar_prefetch = 0 : i64, scratch_operands = 0 : i64, tpu.core_type = #tpu.core_type<tc>, window_params = [{transform_indices = @transform_0, window_bounds = array<i64: 16, 32>}, {pipeline_mode = #tpu.pipeline_mode<synchronous>, transform_indices = @transform_1, window_bounds = array<i64: 32, 16>}, {pipeline_mode = #tpu.pipeline_mode<synchronous>, transform_indices = @transform_2, window_bounds = array<i64: 1, 16>}, {pipeline_mode = #tpu.pipeline_mode<synchronous>, transform_indices = @transform_3, window_bounds = array<i64: 16, 128>}, {pipeline_mode = #tpu.pipeline_mode<synchronous>, transform_indices = @transform_4, window_bounds = array<i64: 1, 128>}, {transform_indices = @transform_5, window_bounds = array<i64: 16, 128>}]} {
    %c0 = arith.constant 0 : index
    %c0_0 = arith.constant 0 : index
    %0 = vector.load %arg1[%c0, %c0_0] : memref<16x32xbf16, #tpu.memory_space<vmem>>, vector<16x32xbf16>
    %c0_1 = arith.constant 0 : index
    %c0_2 = arith.constant 0 : index
    %1 = vector.load %arg2[%c0_1, %c0_2] : memref<32x16xbf16, #tpu.memory_space<vmem>>, vector<32x16xbf16>
    %cst = arith.constant dense<0.000000e+00> : vector<16x16xf32>
    %2 = tpu.matmul %0, %1, %cst {dimension_numbers = #tpu.dot_dimension_numbers<[1], [0], [0], [1], [0, 0, 1, 1], [], []>} : vector<16x32xbf16>, vector<32x16xbf16>, vector<16x16xf32> -> vector<16x16xf32>
    %c0_3 = arith.constant 0 : index
    %c0_4 = arith.constant 0 : index
    %3 = vector.load %arg3[%c0_3, %c0_4] : memref<1x16xf32, #tpu.memory_space<vmem>>, vector<1x16xf32>
    %4 = vector.broadcast %3 : vector<1x16xf32> to vector<16x16xf32>
    %5 = arith.addf %2, %4 : vector<16x16xf32>
    %6 = math.tanh %5 : vector<16x16xf32>
    %7 = arith.truncf %6 : vector<16x16xf32> to vector<16x16xbf16>
    %c0_5 = arith.constant 0 : index
    %c0_6 = arith.constant 0 : index
    %8 = vector.load %arg4[%c0_5, %c0_6] : memref<16x128xbf16, #tpu.memory_space<vmem>>, vector<16x128xbf16>
    %cst_7 = arith.constant dense<0.000000e+00> : vector<16x128xf32>
    %9 = tpu.matmul %7, %8, %cst_7 {dimension_numbers = #tpu.dot_dimension_numbers<[1], [0], [0], [1], [0, 0, 1, 1], [], []>} : vector<16x16xbf16>, vector<16x128xbf16>, vector<16x128xf32> -> vector<16x128xf32>
    %c0_8 = arith.constant 0 : index
    %c0_9 = arith.constant 0 : index
    %10 = vector.load %arg5[%c0_8, %c0_9] : memref<1x128xf32, #tpu.memory_space<vmem>>, vector<1x128xf32>
    %11 = vector.broadcast %10 : vector<1x128xf32> to vector<16x128xf32>
    %12 = arith.addf %9, %11 : vector<16x128xf32>
    %13 = vector.shape_cast %12 : vector<16x128xf32> to vector<2x8x128xf32>
    %cst_10 = arith.constant dense<0xFF800000> : vector<2x128xf32>
    %14 = vector.multi_reduction <maximumf>, %13, %cst_10 [1] : vector<2x8x128xf32> to vector<2x128xf32>
    %15 = vector.shape_cast %14 : vector<2x128xf32> to vector<2x1x128xf32>
    %16 = vector.broadcast %15 : vector<2x1x128xf32> to vector<2x8x128xf32>
    %17 = arith.subf %13, %16 : vector<2x8x128xf32>
    %18 = math.exp %17 : vector<2x8x128xf32>
    %cst_11 = arith.constant dense<0.000000e+00> : vector<2x128xf32>
    %19 = vector.multi_reduction <add>, %18, %cst_11 [1] : vector<2x8x128xf32> to vector<2x128xf32>
    %20 = vector.shape_cast %19 : vector<2x128xf32> to vector<2x1x128xf32>
    %21 = tpu.reciprocal %20 {approx = true} : vector<2x1x128xf32> -> vector<2x1x128xf32>
    %22 = vector.broadcast %21 : vector<2x1x128xf32> to vector<2x8x128xf32>
    %23 = arith.mulf %18, %22 : vector<2x8x128xf32>
    %24 = vector.shape_cast %23 : vector<2x8x128xf32> to vector<16x128xf32>
    %c0_12 = arith.constant 0 : index
    %c0_13 = arith.constant 0 : index
    %25 = vector.load %arg6[%c0_12, %c0_13] : memref<16x128xf32, #tpu.memory_space<vmem>>, vector<16x128xf32>
    tpu.vector_store %arg6[%c0_12, %c0_13], %24 {strides = array<i32>} : memref<16x128xf32, #tpu.memory_space<vmem>>, vector<16x128xf32>,
    return
  }
  func.func @transform_0(%arg0: i32) -> (i32, i32) {
    %c0_i32 = arith.constant 0 : i32
    %c0_i32_0 = arith.constant 0 : i32
    return %arg0, %c0_i32 : i32, i32
  }
  func.func @transform_1(%arg0: i32) -> (i32, i32) {
    %c0_i32 = arith.constant 0 : i32
    %c0_i32_0 = arith.constant 0 : i32
    %c0_i32_1 = arith.constant 0 : i32
    return %c0_i32, %c0_i32_0 : i32, i32
  }
  func.func @transform_2(%arg0: i32) -> (i32, i32) {
    %c0_i32 = arith.constant 0 : i32
    %c0_i32_0 = arith.constant 0 : i32
    %c0_i32_1 = arith.constant 0 : i32
    return %c0_i32, %c0_i32_0 : i32, i32
  }
  func.func @transform_3(%arg0: i32) -> (i32, i32) {
    %c0_i32 = arith.constant 0 : i32
    %c0_i32_0 = arith.constant 0 : i32
    %c0_i32_1 = arith.constant 0 : i32
    return %c0_i32, %c0_i32_0 : i32, i32
  }
  func.func @transform_4(%arg0: i32) -> (i32, i32) {
    %c0_i32 = arith.constant 0 : i32
    %c0_i32_0 = arith.constant 0 : i32
    %c0_i32_1 = arith.constant 0 : i32
    return %c0_i32, %c0_i32_0 : i32, i32
  }
  func.func @transform_5(%arg0: i32) -> (i32, i32) {
    %c0_i32 = arith.constant 0 : i32
    %c0_i32_0 = arith.constant 0 : i32
    return %arg0, %c0_i32 : i32, i32
  }
}

</mosaic_0001>

<llo_original>
// kernel: tpu_custom_call.1
$region0: #{tpu_custom_call.1}
  #allocation0 [shape = 'u32[]', space=smem, size = 0x4, offset = 0x4, fixed_abs, tag = 'smem constant byte address 0x4 - core index']
  #allocation1 [shape = 'u32[144,128]{1,0:T(1,128)}', space=vmem, size = 0x12000, scoped, tag = 'internal scratch']
  %s0 = inlined_call_operand.vmem [shape: bf16[16,32], index: 0, kind: input, shape index: {}]
  %s1 = inlined_call_operand.vmem [shape: bf16[32,16], index: 1, kind: input, shape index: {}]
  %s2 = inlined_call_operand.vmem [shape: f32[1,16], index: 2, kind: input, shape index: {}]
  %s3 = inlined_call_operand.vmem [shape: bf16[16,128], index: 3, kind: input, shape index: {}]
  %s4 = inlined_call_operand.vmem [shape: f32[1,128], index: 4, kind: input, shape index: {}]
  %s5 = inlined_call_operand.hbm [shape: f32[16,128], index: 5, kind: output, shape index: {}]
  %s6 = sld [smem:[#allocation0]]
  $region30: #{tpu_custom_call.1} parent=0
    _
  %s8 = ssub.s32 1, %s6
  %s9 = scalar_select 0, %s8, %s6
  $region1: #{tpu_custom_call.1} parent=0
    #allocation2 [shape = 'u8[8192]{0}', space=vmem, size = 0x2000, scoped, tag = 'output window, operand 0, single buffered']
    #allocation3 [shape = 's32[1]{0}', space=sflag, size = 0x4, scoped, tag = 'scoped memory for tpu_custom_call.1']
    %10 = vsyncpa [#allocation3], 0
    // Predicated region
    $region2: #{tpu_custom_call.1} parent=1 // pred_check
      _
    $region3: #{tpu_custom_call.1} parent=1 // pred_check_branch
      %12 = sbr.rel (0) target = $region5
    $region4: #{tpu_custom_call.1} parent=1 // pred_region
      _
    $region5: #{tpu_custom_call.1} parent=1 // pred_fallthru
      _
    // Predicated region
    $region6: #{tpu_custom_call.1} parent=1 // pred_check
      _
    $region7: #{tpu_custom_call.1} parent=1 // pred_check_branch
      %14 = sbr.rel (0) target = $region9
    $region8: #{tpu_custom_call.1} parent=1 // pred_region
      _
    $region9: #{tpu_custom_call.1} parent=1 // pred_fallthru
      _
    // Predicated region
    $region10: #{tpu_custom_call.1} parent=1 // pred_check
      _
    $region11: #{tpu_custom_call.1} parent=1 // pred_check_branch
      %16 = sbr.rel (0) target = $region13
    $region12: #{tpu_custom_call.1} parent=1 // pred_region
      _
    $region13: #{tpu_custom_call.1} parent=1 // pred_fallthru
      _
    // Predicated region
    $region14: #{tpu_custom_call.1} parent=1 // pred_check
      _
    $region15: #{tpu_custom_call.1} parent=1 // pred_check_branch
      %18 = sbr.rel (0) target = $region17
    $region16: #{tpu_custom_call.1} parent=1 // pred_region
      _
    $region17: #{tpu_custom_call.1} parent=1 // pred_fallthru
      _
    // Predicated region
    $region18: #{tpu_custom_call.1} parent=1 // pred_check
      _
    $region19: #{tpu_custom_call.1} parent=1 // pred_check_branch
      %20 = sbr.rel (0) target = $region21
    $region20: #{tpu_custom_call.1} parent=1 // pred_region
      _
    $region21: #{tpu_custom_call.1} parent=1 // pred_fallthru
      _
    %v22 = vld [vmem:[%s0] sm:$0xf]
    %v23 = vld [vmem:[%s0 + $0x4] sm:$0xf]
    %v24 = vld [vmem:[%s1] sm:$0xf]
    %v25 = vld [vmem:[%s1 + $0x4] sm:$0xf]
    %v26 = vld [vmem:[%s1 + $0x8] sm:$0xf]
    %v27 = vld [vmem:[%s1 + $0xc] sm:$0xf]
    %v28 = vld [vmem:[%s2] sm:$0x1]
    %v30 = vlaneseq
    %v31 = vshrl.u32 %v30, 7
    %v32 = vsub.s32 0, %v31
    %v33 = vrot.slane %v28, %v32
    %v37 = vunpack.c.l.b16 %v22
    %v38 = vunpack.c.l.b16 %v23
    %v39 = vpack.c.b16 %v38, %v37
    %v44 = vunpack.c.l.b16 %v24
    %v45 = vunpack.c.l.b16 %v25
    %v46 = vunpack.c.l.b16 %v26
    %v47 = vunpack.c.l.b16 %v27
    %v48 = vpack.c.b16 %v45, %v44
    %v49 = vpack.c.b16 %v47, %v46
    %vm52 = vcmask 261120
    %v54 = vsel %vm52, %v39, 0
    %56 = vmatprep.subr.bf16.mxu0 0
    %57 = vmatpush1.bf16.msra.mxu0 %v48
    %58 = vmatprep.subr.bf16.mxu0 0
    %59 = vmatpush1.bf16.msra.mxu0 %v49
    %60 = vmatprep.subr.bf16.mxu0 0
    %61 = vmatpush1.bf16.msra.mxu0 0
    %62 = vmatprep.subr.bf16.mxu0 0
    %63 = vmatpush1.bf16.msra.mxu0 0
    %64 = vmatprep.subr.bf16.mxu0 0
    %65 = vmatpush1.bf16.msra.mxu0 0
    %66 = vmatprep.subr.bf16.mxu0 0
    %67 = vmatpush1.bf16.msra.mxu0 0
    %68 = vmatprep.subr.bf16.mxu0 0
    %69 = vmatpush1.bf16.msra.mxu0 0
    %70 = vmatprep.subr.bf16.mxu0 0
    %71 = vmatpush1.bf16.msra.mxu0 0
    %72 = vmatprep.subr.bf16.mxu0 0
    %73 = vmatpush1.bf16.msra.mxu0 0
    %74 = vmatprep.subr.bf16.mxu0 0
    %75 = vmatpush1.bf16.msra.mxu0 0
    %76 = vmatprep.subr.bf16.mxu0 0
    %77 = vmatpush1.bf16.msra.mxu0 0
    %78 = vmatprep.subr.bf16.mxu0 0
    %79 = vmatpush1.bf16.msra.mxu0 0
    %80 = vmatprep.subr.bf16.mxu0 0
    %81 = vmatpush1.bf16.msra.mxu0 0
    %82 = vmatprep.subr.bf16.mxu0 0
    %83 = vmatpush1.bf16.msra.mxu0 0
    %84 = vmatprep.subr.bf16.mxu0 0
    %85 = vmatpush1.bf16.msra.mxu0 0
    %86 = vmatprep.subr.bf16.mxu0 0
    %87 = vmatpush1.bf16.msra.mxu0 0
    %88 = vmatprep.mubr.bf16.mxu0 0
    %89 = vmatmul.mubr.bf16.gmra.mrb[0].mxu0 %v54
    %v90 = vpop.f32.mrb[0].mxu0
    %v91 = vadd.f32 %v33, %v90
    %v92 = vpop.f32.mrb[0].mxu0
    %v93 = vpop.f32.mrb[0].mxu0
    %v94 = vadd.f32 %v33, %v93
    %v95 = vpop.f32.mrb[0].mxu0
    %96 = vdwg.mxu0
    %v97 = vtanh.pop %v91
    %v98 = vtanh.pop %v94
    %v99 = vpack.c.bf16 %v98, %v97
    %v100 = vld [vmem:[%s3] sm:$0xf]
    %v101 = vld [vmem:[%s3 + $0x4] sm:$0xf]
    %v102 = vld [vmem:[%s4] sm:$0x1]
    %v104 = vlaneseq
    %v105 = vshrl.u32 %v104, 7
    %v106 = vsub.s32 0, %v105
    %v107 = vrot.slane %v102, %v106
    %v111 = vunpack.c.l.b16 %v100
    %v112 = vunpack.c.l.b16 %v101
    %v113 = vpack.c.b16 %v112, %v111
    %vm115 = vcmask 130048
    %v117 = vsel %vm115, %v99, 0
    %119 = vmatprep.subr.bf16.mxu0 0
    %120 = vmatpush1.bf16.msra.mxu0 %v113
    %121 = vmatprep.subr.bf16.mxu0 0
    %122 = vmatpush1.bf16.msra.mxu0 0
    %123 = vmatprep.subr.bf16.mxu0 0
    %124 = vmatpush1.bf16.msra.mxu0 0
    %125 = vmatprep.subr.bf16.mxu0 0
    %126 = vmatpush1.bf16.msra.mxu0 0
    %127 = vmatprep.subr.bf16.mxu0 0
    %128 = vmatpush1.bf16.msra.mxu0 0
    %129 = vmatprep.subr.bf16.mxu0 0
    %130 = vmatpush1.bf16.msra.mxu0 0
    %131 = vmatprep.subr.bf16.mxu0 0
    %132 = vmatpush1.bf16.msra.mxu0 0
    %133 = vmatprep.subr.bf16.mxu0 0
    %134 = vmatpush1.bf16.msra.mxu0 0
    %135 = vmatprep.subr.bf16.mxu0 0
    %136 = vmatpush1.bf16.msra.mxu0 0
    %137 = vmatprep.subr.bf16.mxu0 0
    %138 = vmatpush1.bf16.msra.mxu0 0
    %139 = vmatprep.subr.bf16.mxu0 0
    %140 = vmatpush1.bf16.msra.mxu0 0
    %141 = vmatprep.subr.bf16.mxu0 0
    %142 = vmatpush1.bf16.msra.mxu0 0
    %143 = vmatprep.subr.bf16.mxu0 0
    %144 = vmatpush1.bf16.msra.mxu0 0
    %145 = vmatprep.subr.bf16.mxu0 0
    %146 = vmatpush1.bf16.msra.mxu0 0
    %147 = vmatprep.subr.bf16.mxu0 0
    %148 = vmatpush1.bf16.msra.mxu0 0
    %149 = vmatprep.subr.bf16.mxu0 0
    %150 = vmatpush1.bf16.msra.mxu0 0
    %151 = vmatprep.mubr.bf16.mxu0 0
    %152 = vmatmul.mubr.bf16.gmra.mrb[0].mxu0 %v117
    %v153 = vpop.f32.mrb[0].mxu0
    %v154 = vadd.f32 %v107, %v153
    %v155 = vpop.f32.mrb[0].mxu0
    %v156 = vpop.f32.mrb[0].mxu0
    %v157 = vadd.f32 %v107, %v156
    %v158 = vpop.f32.mrb[0].mxu0
    %159 = vdwg.mxu0
    %v160 = vrot.slane %v154, 4
    %v161 = vmax.f32 %v154, %v160
    %v162 = vrot.slane %v161, 2
    %v163 = vmax.f32 %v161, %v162
    %v164 = vrot.slane %v163, 1
    %v165 = vmax.f32 %v163, %v164
    %v166 = vrot.slane %v157, 4
    %v167 = vmax.f32 %v157, %v166
    %v168 = vrot.slane %v167, 2
    %v169 = vmax.f32 %v167, %v168
    %v170 = vrot.slane %v169, 1
    %v171 = vmax.f32 %v169, %v170
    %v172 = vsub.f32 %v154, %v165
    %v173 = vsub.f32 %v157, %v171
    %v174 = vmul.f32 %v172, 1.442695
    %v175 = vpow.pop %v174
    %v176 = vmul.f32 %v173, 1.442695
    %v177 = vpow.pop %v176
    %v178 = vrot.slane %v175, 4
    %v179 = vadd.f32 %v175, %v178
    %v180 = vrot.slane %v179, 2
    %v181 = vadd.f32 %v179, %v180
    %v182 = vrot.slane %v181, 1
    %v183 = vadd.f32 %v181, %v182
    %v184 = vrot.slane %v177, 4
    %v185 = vadd.f32 %v177, %v184
    %v186 = vrot.slane %v185, 2
    %v187 = vadd.f32 %v185, %v186
    %v188 = vrot.slane %v187, 1
    %v189 = vadd.f32 %v187, %v188
    %v190 = vrcp.pop %v183
    %v191 = vrcp.pop %v189
    %v192 = vmul.f32 %v175, %v190
    %v193 = vmul.f32 %v177, %v191
    %194 = vst [vmem:[#allocation2] sm:$0xff] %v192
    %195 = vst [vmem:[#allocation2 + $0x8] sm:$0xff] %v193
    // Predicated region
    $region22: #{tpu_custom_call.1} parent=1 // pred_check
      _
    $region23: #{tpu_custom_call.1} parent=1 // pred_check_branch
      %197 = sbr.rel (0) target = $region25
    $region24: #{tpu_custom_call.1} parent=1 // pred_region
      %s199 = ssub.s32 256, 256
      %200 = vsyncadd [#allocation3], %s199
      %s201 = sshll.u32 [#allocation2], 4
      %s202 = int_to_ptr.vmem [resolvable:$true] %s201
      %207 = dma.vmem_to_hbm [thread:$0]  %s202, 256, %s5, [#allocation3], 128, 128, 8
    $region25: #{tpu_custom_call.1} parent=1 // pred_fallthru
      _
    // Predicated region
    $region26: #{tpu_custom_call.1} parent=1 // pred_check
      _
    $region27: #{tpu_custom_call.1} parent=1 // pred_check_branch
      %209 = sbr.rel (0) target = $region29
    $region28: #{tpu_custom_call.1} parent=1 // pred_region
      %210 = dma.done [#allocation3], 256
    $region29: #{tpu_custom_call.1} parent=1 // pred_fallthru
      _
    %211 = vsyncpa [#allocation3], 1

</llo_original>
